<compile_context>
chip_gen: v6e
topology: v6e:2x2x1
jax: 0.10.0
libtpu: 0.0.40
codegen_flags: <defaults>
</compile_context>

<pallas_src>
import math
import functools

import jax
import jax.numpy as jnp
from jax import lax
from jax.experimental import pallas as pl
from jax.experimental.pallas import tpu as pltpu


def _round_up(x, m):
    return ((x + m - 1) // m) * m


# ----------------------------- kernels --------------------------------------

def _linear_kernel_single_k(x_ref, w_ref, o_ref):
    """K fits in one tile: o[i, j] = x_tile @ w_tile^T, written directly."""
    o_ref[...] = lax.dot_general(
        x_ref[...], w_ref[...],
        (((1,), (1,)), ((), ())),          # contract last dim of x with last dim of w
        preferred_element_type=jnp.float32,
    ).astype(o_ref.dtype)


def _linear_kernel_multi_k(x_ref, w_ref, o_ref, acc_ref):
    """K-tiled reduction with fp32 VMEM accumulator (K is innermost grid axis)."""
    @pl.when(pl.program_id(2) == 0)
    def _():
        acc_ref[...] = jnp.zeros_like(acc_ref)

    acc_ref[...] += lax.dot_general(
        x_ref[...], w_ref[...],
        (((1,), (1,)), ((), ())),
        preferred_element_type=jnp.float32,
    )

    @pl.when(pl.program_id(2) == pl.num_programs(2) - 1)
    def _():
        o_ref[...] = acc_ref[...].astype(o_ref.dtype)


# --------------------------- tiling / wrapper --------------------------------

_TM_MAX = 512     # sublane-dim tile cap
_TN_MAX = 1024    # lane-dense output tile cap (multiple of 256 -> fills 256-wide MXU)
_TK_MAX = 1024    # reduction tile cap


def _pick_tile(dim, max_tile, align):
    """Return (tile, padded_dim) with padded_dim % tile == 0 and tile aligned."""
    if dim <= max_tile:
        padded = _round_up(dim, align)
        return padded, padded
    tile = max_tile                       # max_tile is a multiple of align
    padded = _round_up(dim, tile)
    return tile, padded


def _pallas_linear_2d(x2d, weight):
    """x2d: (M, K), weight: (N, K) -> (M, N). Weight is NOT transposed."""
    M, K = x2d.shape
    N, Kw = weight.shape
    assert K == Kw

    itemsize = jnp.dtype(x2d.dtype).itemsize
    sublane = 8 * max(1, 4 // itemsize)   # 8 for fp32, 16 for bf16 packing

    tm, M_pad = _pick_tile(M, _TM_MAX, sublane)
    tn, N_pad = _pick_tile(N, _TN_MAX, 128)
    tk, K_pad = _pick_tile(K, _TK_MAX, 128)

    # v7x megacore: when M collapses to one tile, split N so both TCs get work.
    if (M_pad // tm) == 1 and (N_pad // tn) == 1 and N_pad >= 256 and (N_pad // 2) % 128 == 0:
        tn = N_pad // 2

    # Zero-pad to exact tile multiples (zeros along K contribute nothing;
    # padded M/N rows are sliced off after the call).
    if (M_pad, K_pad) != (M, K):
        x2d = jnp.pad(x2d, ((0, M_pad - M), (0, K_pad - K)))
    if (N_pad, K_pad) != (N, K):
        weight = jnp.pad(weight, ((0, N_pad - N), (0, K_pad - K)))

    n_k = K_pad // tk

    flops = 2 * M_pad * N_pad * K_pad
    bytes_accessed = (M_pad * K_pad + N_pad * K_pad + M_pad * N_pad) * itemsize
    cost = pl.CostEstimate(flops=flops, transcendentals=0,
                           bytes_accessed=bytes_accessed)

    # Double-buffered x/w/out tiles + fp32 accumulator, with headroom.
    footprint = 2 * (tm * tk + tn * tk + tm * tn) * itemsize + tm * tn * 4
    vmem_limit = int(min(max(2 * footprint, 32 * 1024 * 1024), 60 * 1024 * 1024))

    if n_k == 1:
        out = pl.pallas_call(
            _linear_kernel_single_k,
            out_shape=jax.ShapeDtypeStruct((M_pad, N_pad), x2d.dtype),
            grid_spec=pltpu.PrefetchScalarGridSpec(
                num_scalar_prefetch=0,
                grid=(M_pad // tm, N_pad // tn),
                in_specs=[
                    pl.BlockSpec((tm, tk), lambda i, j: (i, 0)),
                    pl.BlockSpec((tn, tk), lambda i, j: (j, 0)),
                ],
                out_specs=pl.BlockSpec((tm, tn), lambda i, j: (i, j)),
            ),
            compiler_params=pltpu.CompilerParams(
                dimension_semantics=("parallel", "parallel"),
                vmem_limit_bytes=vmem_limit,
            ),
            cost_estimate=cost,
        )(x2d, weight)
    else:
        out = pl.pallas_call(
            _linear_kernel_multi_k,
            out_shape=jax.ShapeDtypeStruct((M_pad, N_pad), x2d.dtype),
            grid_spec=pltpu.PrefetchScalarGridSpec(
                num_scalar_prefetch=0,
                grid=(M_pad // tm, N_pad // tn, n_k),
                in_specs=[
                    pl.BlockSpec((tm, tk), lambda i, j, k: (i, k)),
                    pl.BlockSpec((tn, tk), lambda i, j, k: (j, k)),
                ],
                out_specs=pl.BlockSpec((tm, tn), lambda i, j, k: (i, j)),
                scratch_shapes=[pltpu.VMEM((tm, tn), jnp.float32)],
            ),
            compiler_params=pltpu.CompilerParams(
                dimension_semantics=("parallel", "parallel", "arbitrary"),
                vmem_limit_bytes=vmem_limit,
            ),
            cost_estimate=cost,
        )(x2d, weight)

    if (M_pad, N_pad) != (M, N):
        out = out[:M, :N]
    return out


def linear_forward(x, weight):
    """x: (..., d_in), weight: (d_out, d_in) -> (..., d_out)."""
    d_out, d_in = weight.shape
    *lead, d_in_x = x.shape
    assert d_in_x == d_in

    M = int(functools.reduce(lambda a, b: a * b, lead, 1))
    x2d = x.reshape(M, d_in)
    y2d = _pallas_linear_2d(x2d, weight)
    return y2d.reshape(*lead, d_out)


def init_linear_weight(key, in_features, out_features, dtype=jnp.float32):
    """Mirror torch trunc_normal_(std=sqrt(2/(fan_in+fan_out)), a=-3*std, b=3*std)."""
    std = math.sqrt(2.0 / (in_features + out_features))
    w = jax.random.truncated_normal(
        key, lower=-3.0, upper=3.0, shape=(out_features, in_features), dtype=dtype
    ) * std
    return w


if __name__ == "__main__":
    key = jax.random.PRNGKey(0)
    k_x, k_w = jax.random.split(key)

    batch, seq, d_in, d_out = 2, 8, 32, 64

    x = jax.random.normal(k_x, (batch, seq, d_in), dtype=jnp.float32)
    weight = init_linear_weight(k_w, d_in, d_out, dtype=jnp.float32)

    y = linear_forward(x, weight)
    y = jax.block_until_ready(y)

    # Reference check against plain-JAX einsum.
    y_ref = jnp.einsum("...i,oi->...o", x, weight)
    assert y.shape == (batch, seq, d_out)
    assert jnp.allclose(y, y_ref, atol=1e-5, rtol=1e-5)

    print("KERNEL_OK")
</pallas_src>

<mosaic_0001>
module attributes {stable_mosaic.version = 11 : i64} {
  func.func @_linear_kernel_single_k(%arg0: i32, %arg1: i32, %arg2: memref<16x128xf32, #tpu.memory_space<vmem>>, %arg3: memref<128x128xf32, #tpu.memory_space<vmem>>, %arg4: memref<16x128xf32, #tpu.memory_space<vmem>>) attributes {dimension_semantics = [#tpu.dimension_semantics<parallel>, #tpu.dimension_semantics<parallel>], iteration_bounds = array<i64: 1, 1>, scalar_prefetch = 0 : i64, scratch_operands = 0 : i64, tpu.core_type = #tpu.core_type<tc>, window_params = [{transform_indices = @transform_0, window_bounds = array<i64: 16, 128>}, {transform_indices = @transform_1, window_bounds = array<i64: 128, 128>}, {transform_indices = @transform_2, window_bounds = array<i64: 16, 128>}]} {
    %c0 = arith.constant 0 : index
    %c0_0 = arith.constant 0 : index
    %0 = vector.load %arg2[%c0, %c0_0] : memref<16x128xf32, #tpu.memory_space<vmem>>, vector<16x128xf32>
    %c0_1 = arith.constant 0 : index
    %c0_2 = arith.constant 0 : index
    %1 = vector.load %arg3[%c0_1, %c0_2] : memref<128x128xf32, #tpu.memory_space<vmem>>, vector<128x128xf32>
    %cst = arith.constant dense<0.000000e+00> : vector<16x128xf32>
    %2 = tpu.matmul %0, %1, %cst {dimension_numbers = #tpu.dot_dimension_numbers<[1], [1], [0], [0], [0, 0, 1, 0], [], []>} : vector<16x128xf32>, vector<128x128xf32>, vector<16x128xf32> -> vector<16x128xf32>
    %c0_3 = arith.constant 0 : index
    %c0_4 = arith.constant 0 : index
    %3 = vector.load %arg4[%c0_3, %c0_4] : memref<16x128xf32, #tpu.memory_space<vmem>>, vector<16x128xf32>
    tpu.vector_store %arg4[%c0_3, %c0_4], %2 {strides = array<i32>} : memref<16x128xf32, #tpu.memory_space<vmem>>, vector<16x128xf32>,
    return
  }
  func.func @transform_0(%arg0: i32, %arg1: i32) -> (i32, i32) {
    %c0_i32 = arith.constant 0 : i32
    %c0_i32_0 = arith.constant 0 : i32
    return %arg0, %c0_i32 : i32, i32
  }
  func.func @transform_1(%arg0: i32, %arg1: i32) -> (i32, i32) {
    %c0_i32 = arith.constant 0 : i32
    %c0_i32_0 = arith.constant 0 : i32
    return %arg1, %c0_i32 : i32, i32
  }
  func.func @transform_2(%arg0: i32, %arg1: i32) -> (i32, i32) {
    %c0_i32 = arith.constant 0 : i32
    return %arg0, %arg1 : i32, i32
  }
}

</mosaic_0001>

<llo_original>
// kernel: tpu_custom_call.1
$region0: #{tpu_custom_call.1}
  #allocation0 [shape = 'u32[]', space=smem, size = 0x4, offset = 0x4, fixed_abs, tag = 'smem constant byte address 0x4 - core index']
  #allocation1 [shape = 'u32[144,128]{1,0:T(1,128)}', space=vmem, size = 0x12000, scoped, tag = 'internal scratch']
  %s0 = inlined_call_operand.hbm [shape: f32[16,128], index: 0, kind: input, shape index: {}]
  %s1 = inlined_call_operand.hbm [shape: f32[128,128], index: 1, kind: input, shape index: {}]
  %s2 = inlined_call_operand.hbm [shape: f32[16,128], index: 2, kind: output, shape index: {}]
  %s3 = sld [smem:[#allocation0]]
  $region26: #{tpu_custom_call.1} parent=0
    _
  %s5 = ssub.s32 1, %s3
  %s6 = scalar_select 0, %s5, %s3
  $region1: #{tpu_custom_call.1} parent=0
    #allocation2 [shape = 'u8[8192]{0}', space=vmem, size = 0x2000, scoped, tag = 'input window, operand 0, single buffered']
    #allocation3 [shape = 's32[1]{0}', space=sflag, size = 0x4, scoped, tag = 'scoped memory for tpu_custom_call.1']
    #allocation4 [shape = 's32[1]{0}', space=sflag, size = 0x4, scoped, tag = 'scoped memory for tpu_custom_call.1']
    #allocation5 [shape = 'u8[65536]{0}', space=vmem, size = 0x10000, scoped, tag = 'input window, operand 1, single buffered']
    #allocation6 [shape = 's32[1]{0}', space=sflag, size = 0x4, scoped, tag = 'scoped memory for tpu_custom_call.1']
    #allocation7 [shape = 'u8[8192]{0}', space=vmem, size = 0x2000, scoped, tag = 'output window, operand 0, single buffered']
    %7 = vsyncpa [#allocation3], 0
    %8 = vsyncpa [#allocation6], 0
    %9 = vsyncpa [#allocation4], 0
    // Predicated region
    $region2: #{tpu_custom_call.1} parent=1 // pred_check
      _
    $region3: #{tpu_custom_call.1} parent=1 // pred_check_branch
      %11 = sbr.rel (0) target = $region5
    $region4: #{tpu_custom_call.1} parent=1 // pred_region
      %s13 = ssub.s32 256, 256
      %14 = vsyncadd [#allocation3], %s13
      %s15 = sshll.u32 [#allocation2], 4
      %s16 = int_to_ptr.vmem [resolvable:$true] %s15
      %21 = dma.hbm_to_vmem [thread:$0]  %s0, 256, %s16, [#allocation3], 128, 128, 8
    $region5: #{tpu_custom_call.1} parent=1 // pred_fallthru
      _
    // Predicated region
    $region6: #{tpu_custom_call.1} parent=1 // pred_check
      _
    $region7: #{tpu_custom_call.1} parent=1 // pred_check_branch
      %23 = sbr.rel (0) target = $region9
    $region8: #{tpu_custom_call.1} parent=1 // pred_region
      %s25 = ssub.s32 2048, 2048
      %26 = vsyncadd [#allocation6], %s25
      %s27 = sshll.u32 [#allocation5], 4
      %s28 = int_to_ptr.vmem [resolvable:$true] %s27
      %33 = dma.hbm_to_vmem [thread:$0]  %s1, 2048, %s28, [#allocation6], 128, 128, 8
    $region9: #{tpu_custom_call.1} parent=1 // pred_fallthru
      _
    // Predicated region
    $region10: #{tpu_custom_call.1} parent=1 // pred_check
      _
    $region11: #{tpu_custom_call.1} parent=1 // pred_check_branch
      %35 = sbr.rel (0) target = $region13
    $region12: #{tpu_custom_call.1} parent=1 // pred_region
      %36 = dma.done [#allocation3], 256
    $region13: #{tpu_custom_call.1} parent=1 // pred_fallthru
      _
    // Predicated region
    $region14: #{tpu_custom_call.1} parent=1 // pred_check
      _
    $region15: #{tpu_custom_call.1} parent=1 // pred_check_branch
      %38 = sbr.rel (0) target = $region17
    $region16: #{tpu_custom_call.1} parent=1 // pred_region
      %39 = dma.done [#allocation6], 2048
    $region17: #{tpu_custom_call.1} parent=1 // pred_fallthru
      _
    %v40 = vld [vmem:[#allocation2] sm:$0xff]
    %v41 = vld [vmem:[#allocation2 + $0x8] sm:$0xff]
    %v42 = vld [vmem:[#allocation5] sm:$0xff]
    %v43 = vld [vmem:[#allocation5 + $0x8] sm:$0xff]
    %v44 = vld [vmem:[#allocation5 + $0x10] sm:$0xff]
    %v45 = vld [vmem:[#allocation5 + $0x18] sm:$0xff]
    %v46 = vld [vmem:[#allocation5 + $0x20] sm:$0xff]
    %v47 = vld [vmem:[#allocation5 + $0x28] sm:$0xff]
    %v48 = vld [vmem:[#allocation5 + $0x30] sm:$0xff]
    %v49 = vld [vmem:[#allocation5 + $0x38] sm:$0xff]
    %v50 = vld [vmem:[#allocation5 + $0x40] sm:$0xff]
    %v51 = vld [vmem:[#allocation5 + $0x48] sm:$0xff]
    %v52 = vld [vmem:[#allocation5 + $0x50] sm:$0xff]
    %v53 = vld [vmem:[#allocation5 + $0x58] sm:$0xff]
    %v54 = vld [vmem:[#allocation5 + $0x60] sm:$0xff]
    %v55 = vld [vmem:[#allocation5 + $0x68] sm:$0xff]
    %v56 = vld [vmem:[#allocation5 + $0x70] sm:$0xff]
    %v57 = vld [vmem:[#allocation5 + $0x78] sm:$0xff]
    %58 = vmatprep.subr.mxu0 0.0
    %59 = vmatpush1.xpose.msra.mxu0 %v57
    %60 = vmatprep.subr.mxu0 0.0
    %61 = vmatpush1.xpose.msra.mxu0 %v56
    %62 = vmatprep.subr.mxu0 0.0
    %63 = vmatpush1.xpose.msra.mxu0 %v55
    %64 = vmatprep.subr.mxu0 0.0
    %65 = vmatpush1.xpose.msra.mxu0 %v54
    %66 = vmatprep.subr.mxu0 0.0
    %67 = vmatpush1.xpose.msra.mxu0 %v53
    %68 = vmatprep.subr.mxu0 0.0
    %69 = vmatpush1.xpose.msra.mxu0 %v52
    %70 = vmatprep.subr.mxu0 0.0
    %71 = vmatpush1.xpose.msra.mxu0 %v51
    %72 = vmatprep.subr.mxu0 0.0
    %73 = vmatpush1.xpose.msra.mxu0 %v50
    %74 = vmatprep.subr.mxu0 0.0
    %75 = vmatpush1.xpose.msra.mxu0 %v49
    %76 = vmatprep.subr.mxu0 0.0
    %77 = vmatpush1.xpose.msra.mxu0 %v48
    %78 = vmatprep.subr.mxu0 0.0
    %79 = vmatpush1.xpose.msra.mxu0 %v47
    %80 = vmatprep.subr.mxu0 0.0
    %81 = vmatpush1.xpose.msra.mxu0 %v46
    %82 = vmatprep.subr.mxu0 0.0
    %83 = vmatpush1.xpose.msra.mxu0 %v45
    %84 = vmatprep.subr.mxu0 0.0
    %85 = vmatpush1.xpose.msra.mxu0 %v44
    %86 = vmatprep.subr.mxu0 0.0
    %87 = vmatpush1.xpose.msra.mxu0 %v43
    %88 = vmatprep.subr.mxu0 0.0
    %89 = vmatpush1.xpose.msra.mxu0 %v42
    %90 = vmatprep.subr.mxu0 0.0
    %91 = vmatpush2.xpose.msra.mxu0 0.0
    %92 = vmatprep.subr.mxu0 0.0
    %93 = vmatpush2.xpose.msra.mxu0 0.0
    %94 = vmatprep.subr.mxu0 0.0
    %95 = vmatpush2.xpose.msra.mxu0 0.0
    %96 = vmatprep.subr.mxu0 0.0
    %97 = vmatpush2.xpose.msra.mxu0 0.0
    %98 = vmatprep.subr.mxu0 0.0
    %99 = vmatpush2.xpose.msra.mxu0 0.0
    %100 = vmatprep.subr.mxu0 0.0
    %101 = vmatpush2.xpose.msra.mxu0 0.0
    %102 = vmatprep.subr.mxu0 0.0
    %103 = vmatpush2.xpose.msra.mxu0 0.0
    %104 = vmatprep.subr.mxu0 0.0
    %105 = vmatpush2.xpose.msra.mxu0 0.0
    %106 = vmatprep.subr.mxu0 0.0
    %107 = vmatpush2.xpose.msra.mxu0 0.0
    %108 = vmatprep.subr.mxu0 0.0
    %109 = vmatpush2.xpose.msra.mxu0 0.0
    %110 = vmatprep.subr.mxu0 0.0
    %111 = vmatpush2.xpose.msra.mxu0 0.0
    %112 = vmatprep.subr.mxu0 0.0
    %113 = vmatpush2.xpose.msra.mxu0 0.0
    %114 = vmatprep.subr.mxu0 0.0
    %115 = vmatpush2.xpose.msra.mxu0 0.0
    %116 = vmatprep.subr.mxu0 0.0
    %117 = vmatpush2.xpose.msra.mxu0 0.0
    %118 = vmatprep.subr.mxu0 0.0
    %119 = vmatpush2.xpose.msra.mxu0 0.0
    %120 = vmatprep.subr.mxu0 0.0
    %121 = vmatpush2.xpose.msra.mxu0 0.0
    %122 = vmatprep.mubr.f32.mxu0 0.0
    %123 = vmatmul.mubr.f32.gmra.mxu0 %v40
    %v124 = vpop.f32.mrf.mxu0
    %v125 = vadd.f32 0.0, %v124
    %v126 = vpop.f32.mrf.mxu0
    %127 = vmatprep.mubr.f32.mxu0 0.0
    %128 = vmatmul.mubr.f32.gmra.mxu0 %v41
    %v129 = vpop.f32.mrf.mxu0
    %v130 = vadd.f32 0.0, %v129
    %v131 = vpop.f32.mrf.mxu0
    %132 = vdwg.mxu0
    %133 = vst [vmem:[#allocation7] sm:$0xff] %v125
    %134 = vst [vmem:[#allocation7 + $0x8] sm:$0xff] %v130
    // Predicated region
    $region18: #{tpu_custom_call.1} parent=1 // pred_check
      _
    $region19: #{tpu_custom_call.1} parent=1 // pred_check_branch
      %136 = sbr.rel (0) target = $region21
    $region20: #{tpu_custom_call.1} parent=1 // pred_region
      %s138 = ssub.s32 256, 256
      %139 = vsyncadd [#allocation4], %s138
      %s140 = sshll.u32 [#allocation7], 4
      %s141 = int_to_ptr.vmem [resolvable:$true] %s140
      %146 = dma.vmem_to_hbm [thread:$0]  %s141, 256, %s2, [#allocation4], 128, 128, 8
    $region21: #{tpu_custom_call.1} parent=1 // pred_fallthru
      _
    // Predicated region
    $region22: #{tpu_custom_call.1} parent=1 // pred_check
      _
    $region23: #{tpu_custom_call.1} parent=1 // pred_check_branch
      %148 = sbr.rel (0) target = $region25
    $region24: #{tpu_custom_call.1} parent=1 // pred_region
      %149 = dma.done [#allocation4], 256
    $region25: #{tpu_custom_call.1} parent=1 // pred_fallthru
      _
    %150 = vsyncpa [#allocation3], 1
    %151 = vsyncpa [#allocation6], 1
    %152 = vsyncpa [#allocation4], 1

</llo_original>
